<compile_context>
chip_gen: v7x
topology: tpu7x:2x2x1
jax: 0.10.0
libtpu: 0.0.40
codegen_flags: <defaults>
</compile_context>

<pallas_src>
import functools

import jax
import jax.numpy as jnp
from jax import lax
from jax.experimental import pallas as pl
from jax.experimental.pallas import tpu as pltpu


def _round_up(x, m):
    return (x + m - 1) // m * m


def _clap_zeroshot_kernel(scale_ref,                 # SMEM (1, 1) f32
                          y_ref,                     # VMEM (Bp, 1) int32
                          audio_ref, text_ref,       # VMEM bf16 [Bp,DAp],[Lp,DTp]
                          wa_ref, ba_ref,            # VMEM bf16 [DAp,Pp], f32 [1,Pp]
                          wt_ref, bt_ref,            # VMEM bf16 [DTp,Pp], f32 [1,Pp]
                          logits_ref,                # out VMEM f32 [Bp, Lp]
                          loss_ref,                  # out SMEM f32 (1, 1)
                          *, batch, num_labels):
    # --- projections: bf16 operands, f32 accumulation (MXU) ---
    a = jnp.dot(audio_ref[...], wa_ref[...],
                preferred_element_type=jnp.float32) + ba_ref[...]
    t = jnp.dot(text_ref[...], wt_ref[...],
                preferred_element_type=jnp.float32) + bt_ref[...]

    # --- fused L2 normalize (rsqrt on EUP); matches torch normalize eps=1e-12
    a = a * lax.rsqrt(jnp.maximum(jnp.sum(a * a, axis=-1, keepdims=True), 1e-24))
    t = t * lax.rsqrt(jnp.maximum(jnp.sum(t * t, axis=-1, keepdims=True), 1e-24))

    # --- scaled cosine similarity; contract last axes (no explicit t.T) ---
    scale = scale_ref[0, 0]
    logits = scale * lax.dot_general(
        a.astype(jnp.bfloat16), t.astype(jnp.bfloat16),
        dimension_numbers=(((1,), (1,)), ((), ())),
        preferred_element_type=jnp.float32)
    logits_ref[...] = logits

    # --- CrossEntropyLoss (mean over real batch), padded cols/rows masked ---
    bpad, lpad = logits.shape
    col_ids = lax.broadcasted_iota(jnp.int32, (bpad, lpad), 1)
    col_valid = col_ids < num_labels
    masked = jnp.where(col_valid, logits, -1e30)
    m = jnp.max(masked, axis=-1, keepdims=True)
    lse = m + jnp.log(jnp.sum(jnp.exp(masked - m), axis=-1, keepdims=True))
    tgt = jnp.sum(jnp.where(col_ids == y_ref[...], logits, 0.0),
                  axis=-1, keepdims=True)
    row_valid = lax.broadcasted_iota(jnp.int32, (bpad, 1), 0) < batch
    nll = jnp.where(row_valid, lse - tgt, 0.0)
    loss_ref[0, 0] = jnp.sum(nll) / batch


def clap_zeroshot_forward(audio_feats, text_feats, wa, ba, wt, bt,
                          logit_scale, y):
    B, D_A = audio_feats.shape
    L, D_T = text_feats.shape
    P = wa.shape[1]

    Bp = _round_up(B, 8)
    Lp = _round_up(L, 128)
    DAp = _round_up(D_A, 128)
    DTp = _round_up(D_T, 128)
    Pp = _round_up(P, 128)

    # glue: zero-pad to TPU tile granularity (masked inside the kernel)
    pad2 = lambda x, r, c: jnp.pad(x, ((0, r - x.shape[0]), (0, c - x.shape[1])))
    audio_p = pad2(audio_feats, Bp, DAp).astype(jnp.bfloat16)
    text_p = pad2(text_feats, Lp, DTp).astype(jnp.bfloat16)
    wa_p = pad2(wa, DAp, Pp).astype(jnp.bfloat16)
    wt_p = pad2(wt, DTp, Pp).astype(jnp.bfloat16)
    ba_p = jnp.pad(ba.astype(jnp.float32), (0, Pp - P)).reshape(1, Pp)
    bt_p = jnp.pad(bt.astype(jnp.float32), (0, Pp - P)).reshape(1, Pp)
    scale = jnp.exp(logit_scale).astype(jnp.float32).reshape(1, 1)
    y_p = jnp.pad(y.astype(jnp.int32), (0, Bp - B)).reshape(Bp, 1)

    full = lambda shape: pl.BlockSpec(shape, lambda i: (0,) * len(shape))
    kernel = functools.partial(_clap_zeroshot_kernel, batch=B, num_labels=L)

    logits_p, loss = pl.pallas_call(
        kernel,
        out_shape=(jax.ShapeDtypeStruct((Bp, Lp), jnp.float32),
                   jax.ShapeDtypeStruct((1, 1), jnp.float32)),
        grid=(1,),
        in_specs=[
            pl.BlockSpec(memory_space=pltpu.MemorySpace.SMEM),   # exp(logit_scale)
            full((Bp, 1)),                                       # int32 labels
            full((Bp, DAp)), full((Lp, DTp)),
            full((DAp, Pp)), full((1, Pp)),
            full((DTp, Pp)), full((1, Pp)),
        ],
        out_specs=(full((Bp, Lp)),
                   pl.BlockSpec(memory_space=pltpu.MemorySpace.SMEM)),
        compiler_params=pltpu.CompilerParams(
            dimension_semantics=("arbitrary",)),
    )(scale, y_p, audio_p, text_p, wa_p, ba_p, wt_p, bt_p)

    return loss[0, 0], logits_p[:B, :L]


if __name__ == "__main__":
    # Small synthetic shapes consistent with the zero-shot head:
    B = 2          # batch of audio clips
    L = 4          # number of text labels
    D_A = 32       # pooled audio-encoder feature dim
    D_T = 32       # pooled text-encoder feature dim
    P = 32         # shared projection dim

    key = jax.random.PRNGKey(0)
    k_a, k_t, k_wa, k_ba, k_wt, k_bt, k_y = jax.random.split(key, 7)

    # Encoder pooled features & projection weights kept in bf16 (MXU-native);
    # biases / logit scale in f32. Deterministic synthetic init (no checkpoint).
    audio_feats = jax.random.normal(k_a, (B, D_A), jnp.float32).astype(jnp.bfloat16)
    text_feats = jax.random.normal(k_t, (L, D_T), jnp.float32).astype(jnp.bfloat16)
    wa = (jax.random.normal(k_wa, (D_A, P), jnp.float32) * 0.02).astype(jnp.bfloat16)
    ba = jax.random.normal(k_ba, (P,), jnp.float32) * 0.02
    wt = (jax.random.normal(k_wt, (D_T, P), jnp.float32) * 0.02).astype(jnp.bfloat16)
    bt = jax.random.normal(k_bt, (P,), jnp.float32) * 0.02
    logit_scale = jnp.float32(jnp.log(1.0 / 0.07))   # CLAP-style init

    y = jax.random.randint(k_y, (B,), 0, L)

    loss, logits = clap_zeroshot_forward(audio_feats, text_feats,
                                         wa, ba, wt, bt, logit_scale, y)
    jax.block_until_ready((loss, logits))

    # Plain-JAX reference with the same bf16 rounding points.
    a = audio_feats.astype(jnp.float32) @ wa.astype(jnp.float32) + ba
    t = text_feats.astype(jnp.float32) @ wt.astype(jnp.float32) + bt
    a = a / jnp.maximum(jnp.linalg.norm(a, axis=-1, keepdims=True), 1e-12)
    t = t / jnp.maximum(jnp.linalg.norm(t, axis=-1, keepdims=True), 1e-12)
    ref_logits = jnp.exp(logit_scale) * (
        a.astype(jnp.bfloat16).astype(jnp.float32)
        @ t.astype(jnp.bfloat16).astype(jnp.float32).T)
    ref_loss = jnp.mean(
        jax.nn.logsumexp(ref_logits, axis=-1)
        - jnp.take_along_axis(ref_logits, y[:, None], axis=-1)[:, 0])
    assert jnp.allclose(logits, ref_logits, atol=2e-3, rtol=2e-3)
    assert jnp.allclose(loss, ref_loss, atol=2e-3, rtol=2e-3)

    print("KERNEL_OK")
</pallas_src>

<mosaic_0001>
module attributes {stable_mosaic.version = 11 : i64} {
  func.func @_clap_zeroshot_kernel(%arg0: i32, %arg1: memref<1x1xf32, #tpu.memory_space<smem>>, %arg2: memref<8x1xi32, #tpu.memory_space<vmem>>, %arg3: memref<8x128xbf16, #tpu.memory_space<vmem>>, %arg4: memref<128x128xbf16, #tpu.memory_space<vmem>>, %arg5: memref<128x128xbf16, #tpu.memory_space<vmem>>, %arg6: memref<1x128xf32, #tpu.memory_space<vmem>>, %arg7: memref<128x128xbf16, #tpu.memory_space<vmem>>, %arg8: memref<1x128xf32, #tpu.memory_space<vmem>>, %arg9: memref<8x128xf32, #tpu.memory_space<vmem>>, %arg10: memref<1x1xf32, #tpu.memory_space<smem>>) attributes {dimension_semantics = [#tpu.dimension_semantics<arbitrary>], iteration_bounds = array<i64: 1>, scalar_prefetch = 0 : i64, scratch_operands = 0 : i64, tpu.core_type = #tpu.core_type<tc>, window_params = [{transform_indices = @transform_0, window_bounds = array<i64: 1, 1>}, {pipeline_mode = #tpu.pipeline_mode<synchronous>, transform_indices = @transform_1, window_bounds = array<i64: 8, 1>}, {pipeline_mode = #tpu.pipeline_mode<synchronous>, transform_indices = @transform_2, window_bounds = array<i64: 8, 128>}, {pipeline_mode = #tpu.pipeline_mode<synchronous>, transform_indices = @transform_3, window_bounds = array<i64: 128, 128>}, {pipeline_mode = #tpu.pipeline_mode<synchronous>, transform_indices = @transform_4, window_bounds = array<i64: 128, 128>}, {pipeline_mode = #tpu.pipeline_mode<synchronous>, transform_indices = @transform_5, window_bounds = array<i64: 1, 128>}, {pipeline_mode = #tpu.pipeline_mode<synchronous>, transform_indices = @transform_6, window_bounds = array<i64: 128, 128>}, {pipeline_mode = #tpu.pipeline_mode<synchronous>, transform_indices = @transform_7, window_bounds = array<i64: 1, 128>}, {pipeline_mode = #tpu.pipeline_mode<synchronous>, transform_indices = @transform_8, window_bounds = array<i64: 8, 128>}, {transform_indices = @transform_9, window_bounds = array<i64: 1, 1>}]} {
    %c0 = arith.constant 0 : index
    %c0_0 = arith.constant 0 : index
    %0 = vector.load %arg3[%c0, %c0_0] : memref<8x128xbf16, #tpu.memory_space<vmem>>, vector<8x128xbf16>
    %c0_1 = arith.constant 0 : index
    %c0_2 = arith.constant 0 : index
    %1 = vector.load %arg5[%c0_1, %c0_2] : memref<128x128xbf16, #tpu.memory_space<vmem>>, vector<128x128xbf16>
    %cst = arith.constant dense<0.000000e+00> : vector<8x128xf32>
    %2 = tpu.matmul %0, %1, %cst {dimension_numbers = #tpu.dot_dimension_numbers<[1], [0], [0], [1], [0, 0, 1, 1], [], []>} : vector<8x128xbf16>, vector<128x128xbf16>, vector<8x128xf32> -> vector<8x128xf32>
    %c0_3 = arith.constant 0 : index
    %c0_4 = arith.constant 0 : index
    %3 = vector.load %arg6[%c0_3, %c0_4] : memref<1x128xf32, #tpu.memory_space<vmem>>, vector<1x128xf32>
    %4 = vector.broadcast %3 : vector<1x128xf32> to vector<8x128xf32>
    %5 = arith.addf %2, %4 : vector<8x128xf32>
    %c0_5 = arith.constant 0 : index
    %c0_6 = arith.constant 0 : index
    %6 = vector.load %arg4[%c0_5, %c0_6] : memref<128x128xbf16, #tpu.memory_space<vmem>>, vector<128x128xbf16>
    %c0_7 = arith.constant 0 : index
    %c0_8 = arith.constant 0 : index
    %7 = vector.load %arg7[%c0_7, %c0_8] : memref<128x128xbf16, #tpu.memory_space<vmem>>, vector<128x128xbf16>
    %cst_9 = arith.constant dense<0.000000e+00> : vector<128x128xf32>
    %8 = tpu.matmul %6, %7, %cst_9 {dimension_numbers = #tpu.dot_dimension_numbers<[1], [0], [0], [1], [0, 0, 1, 1], [], []>} : vector<128x128xbf16>, vector<128x128xbf16>, vector<128x128xf32> -> vector<128x128xf32>
    %c0_10 = arith.constant 0 : index
    %c0_11 = arith.constant 0 : index
    %9 = vector.load %arg8[%c0_10, %c0_11] : memref<1x128xf32, #tpu.memory_space<vmem>>, vector<1x128xf32>
    %10 = vector.broadcast %9 : vector<1x128xf32> to vector<128x128xf32>
    %11 = arith.addf %8, %10 : vector<128x128xf32>
    %12 = arith.mulf %5, %5 : vector<8x128xf32>
    %cst_12 = arith.constant dense<0.000000e+00> : vector<8xf32>
    %13 = vector.multi_reduction <add>, %12, %cst_12 [1] : vector<8x128xf32> to vector<8xf32>
    %14 = vector.shape_cast %13 : vector<8xf32> to vector<8x1xf32>
    %cst_13 = arith.constant 1.000000e-24 : f32
    %15 = vector.broadcast %cst_13 : f32 to vector<8x1xf32>
    %16 = arith.maximumf %14, %15 : vector<8x1xf32>
    %17 = math.rsqrt %16 : vector<8x1xf32>
    %18 = vector.broadcast %17 : vector<8x1xf32> to vector<8x128xf32>
    %19 = arith.mulf %5, %18 : vector<8x128xf32>
    %20 = arith.mulf %11, %11 : vector<128x128xf32>
    %cst_14 = arith.constant dense<0.000000e+00> : vector<128xf32>
    %21 = vector.multi_reduction <add>, %20, %cst_14 [1] : vector<128x128xf32> to vector<128xf32>
    %22 = vector.shape_cast %21 : vector<128xf32> to vector<128x1xf32>
    %cst_15 = arith.constant 1.000000e-24 : f32
    %23 = vector.broadcast %cst_15 : f32 to vector<128x1xf32>
    %24 = arith.maximumf %22, %23 : vector<128x1xf32>
    %25 = math.rsqrt %24 : vector<128x1xf32>
    %26 = vector.broadcast %25 : vector<128x1xf32> to vector<128x128xf32>
    %27 = arith.mulf %11, %26 : vector<128x128xf32>
    %c0_16 = arith.constant 0 : index
    %c0_17 = arith.constant 0 : index
    %28 = memref.load %arg1[%c0_16, %c0_17] : memref<1x1xf32, #tpu.memory_space<smem>>
    %29 = arith.truncf %19 : vector<8x128xf32> to vector<8x128xbf16>
    %30 = arith.truncf %27 : vector<128x128xf32> to vector<128x128xbf16>
    %cst_18 = arith.constant dense<0.000000e+00> : vector<8x128xf32>
    %31 = tpu.matmul %29, %30, %cst_18 {dimension_numbers = #tpu.dot_dimension_numbers<[1], [1], [0], [0], [0, 0, 1, 0], [], []>} : vector<8x128xbf16>, vector<128x128xbf16>, vector<8x128xf32> -> vector<8x128xf32>
    %32 = vector.broadcast %28 : f32 to vector<8x128xf32>
    %33 = arith.mulf %32, %31 : vector<8x128xf32>
    %c0_19 = arith.constant 0 : index
    %c0_20 = arith.constant 0 : index
    %34 = vector.load %arg9[%c0_19, %c0_20] : memref<8x128xf32, #tpu.memory_space<vmem>>, vector<8x128xf32>
    tpu.vector_store %arg9[%c0_19, %c0_20], %33 {strides = array<i32>} : memref<8x128xf32, #tpu.memory_space<vmem>>, vector<8x128xf32>,
    %35 = tpu.iota {dimensions = array<i32: 1>} : vector<8x128xi32>
    %c4_i32 = arith.constant 4 : i32
    %36 = vector.broadcast %c4_i32 : i32 to vector<8x128xi32>
    %37 = arith.cmpi slt, %35, %36 : vector<8x128xi32>
    %cst_21 = arith.constant -1.000000e+30 : f32
    %38 = vector.broadcast %cst_21 : f32 to vector<8x128xf32>
    %39 = arith.select %37, %33, %38 : vector<8x128xi1>, vector<8x128xf32>
    %cst_22 = arith.constant dense<0xFF800000> : vector<8xf32>
    %40 = vector.multi_reduction <maximumf>, %39, %cst_22 [1] : vector<8x128xf32> to vector<8xf32>
    %41 = vector.shape_cast %40 : vector<8xf32> to vector<8x1xf32>
    %42 = vector.broadcast %41 : vector<8x1xf32> to vector<8x128xf32>
    %43 = arith.subf %39, %42 : vector<8x128xf32>
    %44 = math.exp %43 : vector<8x128xf32>
    %cst_23 = arith.constant dense<0.000000e+00> : vector<8xf32>
    %45 = vector.multi_reduction <add>, %44, %cst_23 [1] : vector<8x128xf32> to vector<8xf32>
    %46 = vector.shape_cast %45 : vector<8xf32> to vector<8x1xf32>
    %47 = math.log %46 : vector<8x1xf32>
    %48 = arith.addf %41, %47 : vector<8x1xf32>
    %c0_24 = arith.constant 0 : index
    %c0_25 = arith.constant 0 : index
    %49 = vector.load %arg2[%c0_24, %c0_25] : memref<8x1xi32, #tpu.memory_space<vmem>>, vector<8x1xi32>
    %50 = vector.broadcast %49 : vector<8x1xi32> to vector<8x128xi32>
    %51 = arith.cmpi eq, %35, %50 : vector<8x128xi32>
    %cst_26 = arith.constant 0.000000e+00 : f32
    %52 = vector.broadcast %cst_26 : f32 to vector<8x128xf32>
    %53 = arith.select %51, %33, %52 : vector<8x128xi1>, vector<8x128xf32>
    %cst_27 = arith.constant dense<0.000000e+00> : vector<8xf32>
    %54 = vector.multi_reduction <add>, %53, %cst_27 [1] : vector<8x128xf32> to vector<8xf32>
    %55 = vector.shape_cast %54 : vector<8xf32> to vector<8x1xf32>
    %56 = tpu.iota {dimensions = array<i32: 0>} : vector<8x1xi32>
    %c2_i32 = arith.constant 2 : i32
    %57 = vector.broadcast %c2_i32 : i32 to vector<8x1xi32>
    %58 = arith.cmpi slt, %56, %57 : vector<8x1xi32>
    %59 = arith.subf %48, %55 : vector<8x1xf32>
    %cst_28 = arith.constant 0.000000e+00 : f32
    %60 = vector.broadcast %cst_28 : f32 to vector<8x1xf32>
    %61 = arith.select %58, %59, %60 : vector<8x1xi1>, vector<8x1xf32>
    %62 = vector.shape_cast %61 : vector<8x1xf32> to vector<1x8x1xf32>
    %cst_29 = arith.constant dense<0.000000e+00> : vector<1xf32>
    %63 = vector.multi_reduction <add>, %62, %cst_29 [1, 2] : vector<1x8x1xf32> to vector<1xf32>
    %64 = vector.shape_cast %63 : vector<1xf32> to vector<1x1x1xf32>
    %65 = vector.extract %64[0, 0, 0] : f32 from vector<1x1x1xf32>
    %cst_30 = arith.constant 2.000000e+00 : f32
    %66 = arith.divf %65, %cst_30 : f32
    %c0_31 = arith.constant 0 : index
    %c0_32 = arith.constant 0 : index
    %67 = memref.load %arg10[%c0_31, %c0_32] : memref<1x1xf32, #tpu.memory_space<smem>>
    memref.store %66, %arg10[%c0_31, %c0_32] : memref<1x1xf32, #tpu.memory_space<smem>>
    return
  }
  func.func @transform_0(%arg0: i32) -> (i32, i32) {
    %c0_i32 = arith.constant 0 : i32
    %c0_i32_0 = arith.constant 0 : i32
    %c0_i32_1 = arith.constant 0 : i32
    return %c0_i32, %c0_i32_0 : i32, i32
  }
  func.func @transform_1(%arg0: i32) -> (i32, i32) {
    %c0_i32 = arith.constant 0 : i32
    %c0_i32_0 = arith.constant 0 : i32
    %c0_i32_1 = arith.constant 0 : i32
    return %c0_i32, %c0_i32_0 : i32, i32
  }
  func.func @transform_2(%arg0: i32) -> (i32, i32) {
    %c0_i32 = arith.constant 0 : i32
    %c0_i32_0 = arith.constant 0 : i32
    %c0_i32_1 = arith.constant 0 : i32
    return %c0_i32, %c0_i32_0 : i32, i32
  }
  func.func @transform_3(%arg0: i32) -> (i32, i32) {
    %c0_i32 = arith.constant 0 : i32
    %c0_i32_0 = arith.constant 0 : i32
    %c0_i32_1 = arith.constant 0 : i32
    return %c0_i32, %c0_i32_0 : i32, i32
  }
  func.func @transform_4(%arg0: i32) -> (i32, i32) {
    %c0_i32 = arith.constant 0 : i32
    %c0_i32_0 = arith.constant 0 : i32
    %c0_i32_1 = arith.constant 0 : i32
    return %c0_i32, %c0_i32_0 : i32, i32
  }
  func.func @transform_5(%arg0: i32) -> (i32, i32) {
    %c0_i32 = arith.constant 0 : i32
    %c0_i32_0 = arith.constant 0 : i32
    %c0_i32_1 = arith.constant 0 : i32
    return %c0_i32, %c0_i32_0 : i32, i32
  }
  func.func @transform_6(%arg0: i32) -> (i32, i32) {
    %c0_i32 = arith.constant 0 : i32
    %c0_i32_0 = arith.constant 0 : i32
    %c0_i32_1 = arith.constant 0 : i32
    return %c0_i32, %c0_i32_0 : i32, i32
  }
  func.func @transform_7(%arg0: i32) -> (i32, i32) {
    %c0_i32 = arith.constant 0 : i32
    %c0_i32_0 = arith.constant 0 : i32
    %c0_i32_1 = arith.constant 0 : i32
    return %c0_i32, %c0_i32_0 : i32, i32
  }
  func.func @transform_8(%arg0: i32) -> (i32, i32) {
    %c0_i32 = arith.constant 0 : i32
    %c0_i32_0 = arith.constant 0 : i32
    %c0_i32_1 = arith.constant 0 : i32
    return %c0_i32, %c0_i32_0 : i32, i32
  }
  func.func @transform_9(%arg0: i32) -> (i32, i32) {
    %c0_i32 = arith.constant 0 : i32
    %c0_i32_0 = arith.constant 0 : i32
    %c0_i32_1 = arith.constant 0 : i32
    return %c0_i32, %c0_i32_0 : i32, i32
  }
}

</mosaic_0001>

<llo_original>
// kernel: tpu_custom_call.1
$region0: #{tpu_custom_call.1}
  #allocation0 [shape = 'u32[]', space=smem, size = 0x4, offset = 0x4, fixed_abs, tag = 'smem constant byte address 0x4 - core index']
  #allocation1 [shape = 'u32[144,128]{1,0:T(1,128)}', space=vmem, size = 0x12000, scoped, tag = 'internal scratch']
  #allocation2 [shape = 'f32[1,1]{1,0:T(1,128)S(6)}', space=smem, size = 0x200, scoped, tag = 'scoped memory for tpu_custom_call.1']
  %s0 = inlined_call_operand.<no memory space> [shape: f32[1,1], index: 0, kind: input, shape index: {}]
  %s1 = inlined_call_operand.vmem [shape: s32[8,1], index: 1, kind: input, shape index: {}]
  %s2 = inlined_call_operand.vmem [shape: bf16[8,128], index: 2, kind: input, shape index: {}]
  %s3 = inlined_call_operand.hbm [shape: bf16[128,128], index: 3, kind: input, shape index: {}]
  %s4 = inlined_call_operand.hbm [shape: bf16[128,128], index: 4, kind: input, shape index: {}]
  %s5 = inlined_call_operand.vmem [shape: f32[1,128], index: 5, kind: input, shape index: {}]
  %s6 = inlined_call_operand.hbm [shape: bf16[128,128], index: 6, kind: input, shape index: {}]
  %s7 = inlined_call_operand.vmem [shape: f32[1,128], index: 7, kind: input, shape index: {}]
  %s8 = inlined_call_operand.hbm [shape: f32[8,128], index: 8, kind: output, shape index: {0}]
  %s9 = inlined_call_operand.hbm [shape: f32[1,1], index: 9, kind: output, shape index: {1}]
  %10 = xla_tuple %s8, %s9
  %s11 = sld [smem:[#allocation0]]
  $region62: #{tpu_custom_call.1} parent=0
    _
  %s13 = ssub.s32 1, %s11
  %s14 = scalar_select 0, %s13, %s11
  %15 = sst [smem:[#allocation2]] %s0
  $region1: #{tpu_custom_call.1} parent=0
    #allocation3 [shape = 'u8[32768]{0}', space=vmem, size = 0x8000, scoped, tag = 'input window, operand 3, single buffered']
    #allocation4 [shape = 's32[1]{0}', space=sflag, size = 0x4, scoped, tag = 'scoped memory for tpu_custom_call.1']
    #allocation5 [shape = 's32[1]{0}', space=sflag, size = 0x4, scoped, tag = 'scoped memory for tpu_custom_call.1']
    #allocation6 [shape = 's32[1]{0}', space=sflag, size = 0x4, scoped, tag = 'scoped memory for tpu_custom_call.1']
    #allocation7 [shape = 'u8[32768]{0}', space=vmem, size = 0x8000, scoped, tag = 'input window, operand 4, single buffered']
    #allocation8 [shape = 's32[1]{0}', space=sflag, size = 0x4, scoped, tag = 'scoped memory for tpu_custom_call.1']
    #allocation9 [shape = 'u8[32768]{0}', space=vmem, size = 0x8000, scoped, tag = 'input window, operand 6, single buffered']
    #allocation10 [shape = 'u8[4096]{0}', space=vmem, size = 0x1000, scoped, tag = 'output window, operand 0, single buffered']
    #allocation11 [shape = 'u8[512]{0}', space=smem, size = 0x200, scoped, tag = 'output window, operand 1, single buffered']
    %16 = vsyncpa [#allocation4], 0
    %17 = vsyncpa [#allocation8], 0
    %18 = vsyncpa [#allocation5], 0
    %19 = vsyncpa [#allocation6], 0
    // Predicated region
    $region2: #{tpu_custom_call.1} parent=1 // pred_check
      _
    $region3: #{tpu_custom_call.1} parent=1 // pred_check_branch
      %21 = sbr.rel (0) target = $region5
    $region4: #{tpu_custom_call.1} parent=1 // pred_region
      _
    $region5: #{tpu_custom_call.1} parent=1 // pred_fallthru
      _
    // Predicated region
    $region6: #{tpu_custom_call.1} parent=1 // pred_check
      _
    $region7: #{tpu_custom_call.1} parent=1 // pred_check_branch
      %23 = sbr.rel (0) target = $region9
    $region8: #{tpu_custom_call.1} parent=1 // pred_region
      _
    $region9: #{tpu_custom_call.1} parent=1 // pred_fallthru
      _
    // Predicated region
    $region10: #{tpu_custom_call.1} parent=1 // pred_check
      _
    $region11: #{tpu_custom_call.1} parent=1 // pred_check_branch
      %25 = sbr.rel (0) target = $region13
    $region12: #{tpu_custom_call.1} parent=1 // pred_region
      _
    $region13: #{tpu_custom_call.1} parent=1 // pred_fallthru
      _
    // Predicated region
    $region14: #{tpu_custom_call.1} parent=1 // pred_check
      _
    $region15: #{tpu_custom_call.1} parent=1 // pred_check_branch
      %27 = sbr.rel (0) target = $region17
    $region16: #{tpu_custom_call.1} parent=1 // pred_region
      %s29 = ssub.s32 1024, 1024
      %30 = vsyncadd [#allocation4], %s29
      %s31 = sshll.u32 [#allocation3], 4
      %s32 = int_to_ptr.vmem [resolvable:$true] %s31
      %37 = dma.hbm_to_vmem [thread:$0]  %s3, 1024, %s32, [#allocation4], 64, 64, 4
    $region17: #{tpu_custom_call.1} parent=1 // pred_fallthru
      _
    // Predicated region
    $region18: #{tpu_custom_call.1} parent=1 // pred_check
      _
    $region19: #{tpu_custom_call.1} parent=1 // pred_check_branch
      %39 = sbr.rel (0) target = $region21
    $region20: #{tpu_custom_call.1} parent=1 // pred_region
      %s41 = ssub.s32 1024, 1024
      %42 = vsyncadd [#allocation8], %s41
      %s43 = sshll.u32 [#allocation7], 4
      %s44 = int_to_ptr.vmem [resolvable:$true] %s43
      %49 = dma.hbm_to_vmem [thread:$0]  %s4, 1024, %s44, [#allocation8], 64, 64, 4
    $region21: #{tpu_custom_call.1} parent=1 // pred_fallthru
      _
    // Predicated region
    $region22: #{tpu_custom_call.1} parent=1 // pred_check
      _
    $region23: #{tpu_custom_call.1} parent=1 // pred_check_branch
      %51 = sbr.rel (0) target = $region25
    $region24: #{tpu_custom_call.1} parent=1 // pred_region
      _
    $region25: #{tpu_custom_call.1} parent=1 // pred_fallthru
      _
    // Predicated region
    $region26: #{tpu_custom_call.1} parent=1 // pred_check
      _
    $region27: #{tpu_custom_call.1} parent=1 // pred_check_branch
      %53 = sbr.rel (0) target = $region29
    $region28: #{tpu_custom_call.1} parent=1 // pred_region
      %s55 = ssub.s32 1024, 1024
      %56 = vsyncadd [#allocation8], %s55
      %s57 = sshll.u32 [#allocation9], 4
      %s58 = int_to_ptr.vmem [resolvable:$true] %s57
      %63 = dma.hbm_to_vmem [thread:$0]  %s6, 1024, %s58, [#allocation8], 64, 64, 4
    $region29: #{tpu_custom_call.1} parent=1 // pred_fallthru
      _
    // Predicated region
    $region30: #{tpu_custom_call.1} parent=1 // pred_check
      _
    $region31: #{tpu_custom_call.1} parent=1 // pred_check_branch
      %65 = sbr.rel (0) target = $region33
    $region32: #{tpu_custom_call.1} parent=1 // pred_region
      _
    $region33: #{tpu_custom_call.1} parent=1 // pred_fallthru
      _
    // Predicated region
    $region34: #{tpu_custom_call.1} parent=1 // pred_check
      _
    $region35: #{tpu_custom_call.1} parent=1 // pred_check_branch
      %67 = sbr.rel (0) target = $region37
    $region36: #{tpu_custom_call.1} parent=1 // pred_region
      %68 = dma.done [#allocation4], 1024
    $region37: #{tpu_custom_call.1} parent=1 // pred_fallthru
      _
    // Predicated region
    $region38: #{tpu_custom_call.1} parent=1 // pred_check
      _
    $region39: #{tpu_custom_call.1} parent=1 // pred_check_branch
      %70 = sbr.rel (0) target = $region41
    $region40: #{tpu_custom_call.1} parent=1 // pred_region
      %71 = dma.done [#allocation8], 1024
    $region41: #{tpu_custom_call.1} parent=1 // pred_fallthru
      _
    // Predicated region
    $region42: #{tpu_custom_call.1} parent=1 // pred_check
      _
    $region43: #{tpu_custom_call.1} parent=1 // pred_check_branch
      %73 = sbr.rel (0) target = $region45
    $region44: #{tpu_custom_call.1} parent=1 // pred_region
      %74 = dma.done [#allocation8], 1024
    $region45: #{tpu_custom_call.1} parent=1 // pred_fallthru
      _
    %v76 = vld [vmem:[%s2] sm:$0xf]
    %v77 = vld [vmem:[#allocation7] sm:$0xf]
    %v78 = vld [vmem:[#allocation7 + $0x4] sm:$0xf]
    %v79 = vld [vmem:[#allocation7 + $0x8] sm:$0xf]
    %v80 = vld [vmem:[#allocation7 + $0xc] sm:$0xf]
    %v81 = vld [vmem:[#allocation7 + $0x10] sm:$0xf]
    %v82 = vld [vmem:[#allocation7 + $0x14] sm:$0xf]
    %v83 = vld [vmem:[#allocation7 + $0x18] sm:$0xf]
    %v84 = vld [vmem:[#allocation7 + $0x1c] sm:$0xf]
    %v85 = vld [vmem:[#allocation7 + $0x20] sm:$0xf]
    %v86 = vld [vmem:[#allocation7 + $0x24] sm:$0xf]
    %v87 = vld [vmem:[#allocation7 + $0x28] sm:$0xf]
    %v88 = vld [vmem:[#allocation7 + $0x2c] sm:$0xf]
    %v89 = vld [vmem:[#allocation7 + $0x30] sm:$0xf]
    %v90 = vld [vmem:[#allocation7 + $0x34] sm:$0xf]
    %v91 = vld [vmem:[#allocation7 + $0x38] sm:$0xf]
    %v92 = vld [vmem:[#allocation7 + $0x3c] sm:$0xf]
    %v93 = vld [vmem:[%s5] sm:$0x1]
    %v95 = vlaneseq
    %v96 = vshrl.u32 %v95, 7
    %v97 = vsub.s32 0, %v96
    %v98 = vrot.slane %v93, %v97
    %v116 = vunpack.c.l.b16 %v77
    %v117 = vunpack.c.l.b16 %v78
    %v118 = vunpack.c.l.b16 %v79
    %v119 = vunpack.c.l.b16 %v80
    %v120 = vunpack.c.l.b16 %v81
    %v121 = vunpack.c.l.b16 %v82
    %v122 = vunpack.c.l.b16 %v83
    %v123 = vunpack.c.l.b16 %v84
    %v124 = vunpack.c.l.b16 %v85
    %v125 = vunpack.c.l.b16 %v86
    %v126 = vunpack.c.l.b16 %v87
    %v127 = vunpack.c.l.b16 %v88
    %v128 = vunpack.c.l.b16 %v89
    %v129 = vunpack.c.l.b16 %v90
    %v130 = vunpack.c.l.b16 %v91
    %v131 = vunpack.c.l.b16 %v92
    %v132 = vpack.c.b16 %v117, %v116
    %v133 = vpack.c.b16 %v119, %v118
    %v134 = vpack.c.b16 %v121, %v120
    %v135 = vpack.c.b16 %v123, %v122
    %v136 = vpack.c.b16 %v125, %v124
    %v137 = vpack.c.b16 %v127, %v126
    %v138 = vpack.c.b16 %v129, %v128
    %v139 = vpack.c.b16 %v131, %v130
    %148 = vmatprep.subr.bf16.mxu0 0
    %149 = vmatpush1.bf16.msra.mxu0 %v132
    %150 = vmatprep.subr.bf16.mxu0 0
    %151 = vmatpush1.bf16.msra.mxu0 %v133
    %152 = vmatprep.subr.bf16.mxu0 0
    %153 = vmatpush1.bf16.msra.mxu0 %v134
    %154 = vmatprep.subr.bf16.mxu0 0
    %155 = vmatpush1.bf16.msra.mxu0 %v135
    %156 = vmatprep.subr.bf16.mxu0 0
    %157 = vmatpush1.bf16.msra.mxu0 %v136
    %158 = vmatprep.subr.bf16.mxu0 0
    %159 = vmatpush1.bf16.msra.mxu0 %v137
    %160 = vmatprep.subr.bf16.mxu0 0
    %161 = vmatpush1.bf16.msra.mxu0 %v138
    %162 = vmatprep.subr.bf16.mxu0 0
    %163 = vmatpush1.bf16.msra.mxu0 %v139
    %164 = vmatprep.subr.bf16.mxu0 0
    %165 = vmatpush1.bf16.msra.mxu0 0
    %166 = vmatprep.subr.bf16.mxu0 0
    %167 = vmatpush1.bf16.msra.mxu0 0
    %168 = vmatprep.subr.bf16.mxu0 0
    %169 = vmatpush1.bf16.msra.mxu0 0
    %170 = vmatprep.subr.bf16.mxu0 0
    %171 = vmatpush1.bf16.msra.mxu0 0
    %172 = vmatprep.subr.bf16.mxu0 0
    %173 = vmatpush1.bf16.msra.mxu0 0
    %174 = vmatprep.subr.bf16.mxu0 0
    %175 = vmatpush1.bf16.msra.mxu0 0
    %176 = vmatprep.subr.bf16.mxu0 0
    %177 = vmatpush1.bf16.msra.mxu0 0
    %178 = vmatprep.subr.bf16.mxu0 0
    %179 = vmatpush1.bf16.msra.mxu0 0
    %180 = vmatprep.mubr.bf16.mxu0 0
    %181 = vmatmul.mubr.bf16.gmra.mrb[0].mxu0 %v76
    %v182 = vpop.f32.mrb[0].mxu0
    %v183 = vadd.f32 %v98, %v182
    %v184 = vpop.f32.mrb[0].mxu0
    %v185 = vpop.f32.mrb[0].mxu0
    %v186 = vpop.f32.mrb[0].mxu0
    %187 = vdwg.mxu0
    %v188 = vld [vmem:[#allocation3] sm:$0xf]
    %v189 = vld [vmem:[#allocation3 + $0x4] sm:$0xf]
    %v190 = vld [vmem:[#allocation3 + $0x8] sm:$0xf]
    %v191 = vld [vmem:[#allocation3 + $0xc] sm:$0xf]
    %v192 = vld [vmem:[#allocation3 + $0x10] sm:$0xf]
    %v193 = vld [vmem:[#allocation3 + $0x14] sm:$0xf]
    %v194 = vld [vmem:[#allocation3 + $0x18] sm:$0xf]
    %v195 = vld [vmem:[#allocation3 + $0x1c] sm:$0xf]
    %v196 = vld [vmem:[#allocation3 + $0x20] sm:$0xf]
    %v197 = vld [vmem:[#allocation3 + $0x24] sm:$0xf]
    %v198 = vld [vmem:[#allocation3 + $0x28] sm:$0xf]
    %v199 = vld [vmem:[#allocation3 + $0x2c] sm:$0xf]
    %v200 = vld [vmem:[#allocation3 + $0x30] sm:$0xf]
    %v201 = vld [vmem:[#allocation3 + $0x34] sm:$0xf]
    %v202 = vld [vmem:[#allocation3 + $0x38] sm:$0xf]
    %v203 = vld [vmem:[#allocation3 + $0x3c] sm:$0xf]
    %v204 = vld [vmem:[#allocation9] sm:$0xf]
    %v205 = vld [vmem:[#allocation9 + $0x4] sm:$0xf]
    %v206 = vld [vmem:[#allocation9 + $0x8] sm:$0xf]
    %v207 = vld [vmem:[#allocation9 + $0xc] sm:$0xf]
    %v208 = vld [vmem:[#allocation9 + $0x10] sm:$0xf]
    %v209 = vld [vmem:[#allocation9 + $0x14] sm:$0xf]
    %v210 = vld [vmem:[#allocation9 + $0x18] sm:$0xf]
    %v211 = vld [vmem:[#allocation9 + $0x1c] sm:$0xf]
    %v212 = vld [vmem:[#allocation9 + $0x20] sm:$0xf]
    %v213 = vld [vmem:[#allocation9 + $0x24] sm:$0xf]
    %v214 = vld [vmem:[#allocation9 + $0x28] sm:$0xf]
    %v215 = vld [vmem:[#allocation9 + $0x2c] sm:$0xf]
    %v216 = vld [vmem:[#allocation9 + $0x30] sm:$0xf]
    %v217 = vld [vmem:[#allocation9 + $0x34] sm:$0xf]
    %v218 = vld [vmem:[#allocation9 + $0x38] sm:$0xf]
    %v219 = vld [vmem:[#allocation9 + $0x3c] sm:$0xf]
    %v220 = vld [vmem:[%s7] sm:$0x1]
    %v222 = vlaneseq
    %v223 = vshrl.u32 %v222, 7
    %v224 = vsub.s32 0, %v223
    %v225 = vrot.slane %v220, %v224
    %v243 = vunpack.c.l.b16 %v188
    %v244 = vunpack.c.l.b16 %v189
    %v245 = vunpack.c.l.b16 %v190
    %v246 = vunpack.c.l.b16 %v191
    %v247 = vunpack.c.l.b16 %v192
    %v248 = vunpack.c.l.b16 %v193
    %v249 = vunpack.c.l.b16 %v194
    %v250 = vunpack.c.l.b16 %v195
    %v251 = vunpack.c.l.b16 %v196
    %v252 = vunpack.c.l.b16 %v197
    %v253 = vunpack.c.l.b16 %v198
    %v254 = vunpack.c.l.b16 %v199
    %v255 = vunpack.c.l.b16 %v200
    %v256 = vunpack.c.l.b16 %v201
    %v257 = vunpack.c.l.b16 %v202
    %v258 = vunpack.c.l.b16 %v203
    %v259 = vpack.c.b16 %v244, %v243
    %v260 = vpack.c.b16 %v246, %v245
    %v261 = vpack.c.b16 %v248, %v247
    %v262 = vpack.c.b16 %v250, %v249
    %v263 = vpack.c.b16 %v252, %v251
    %v264 = vpack.c.b16 %v254, %v253
    %v265 = vpack.c.b16 %v256, %v255
    %v266 = vpack.c.b16 %v258, %v257
    %v291 = vunpack.c.l.b16 %v204
    %v292 = vunpack.c.l.b16 %v205
    %v293 = vunpack.c.l.b16 %v206
    %v294 = vunpack.c.l.b16 %v207
    %v295 = vunpack.c.l.b16 %v208
    %v296 = vunpack.c.l.b16 %v209
    %v297 = vunpack.c.l.b16 %v210
    %v298 = vunpack.c.l.b16 %v211
    %v299 = vunpack.c.l.b16 %v212
    %v300 = vunpack.c.l.b16 %v213
    %v301 = vunpack.c.l.b16 %v214
    %v302 = vunpack.c.l.b16 %v215
    %v303 = vunpack.c.l.b16 %v216
    %v304 = vunpack.c.l.b16 %v217
    %v305 = vunpack.c.l.b16 %v218
    %v306 = vunpack.c.l.b16 %v219
    %v307 = vpack.c.b16 %v292, %v291
    %v308 = vpack.c.b16 %v294, %v293
    %v309 = vpack.c.b16 %v296, %v295
    %v310 = vpack.c.b16 %v298, %v297
    %v311 = vpack.c.b16 %v300, %v299
    %v312 = vpack.c.b16 %v302, %v301
    %v313 = vpack.c.b16 %v304, %v303
    %v314 = vpack.c.b16 %v306, %v305
    %323 = vmatprep.subr.bf16.mxu0 0
    %324 = vmatpush1.bf16.msra.mxu0 %v307
    %325 = vmatprep.subr.bf16.mxu0 0
    %326 = vmatpush1.bf16.msra.mxu0 %v308
    %327 = vmatprep.subr.bf16.mxu0 0
    %328 = vmatpush1.bf16.msra.mxu0 %v309
    %329 = vmatprep.subr.bf16.mxu0 0
    %330 = vmatpush1.bf16.msra.mxu0 %v310
    %331 = vmatprep.subr.bf16.mxu0 0
    %332 = vmatpush1.bf16.msra.mxu0 %v311
    %333 = vmatprep.subr.bf16.mxu0 0
    %334 = vmatpush1.bf16.msra.mxu0 %v312
    %335 = vmatprep.subr.bf16.mxu0 0
    %336 = vmatpush1.bf16.msra.mxu0 %v313
    %337 = vmatprep.subr.bf16.mxu0 0
    %338 = vmatpush1.bf16.msra.mxu0 %v314
    %339 = vmatprep.subr.bf16.mxu0 0
    %340 = vmatpush1.bf16.msra.mxu0 0
    %341 = vmatprep.subr.bf16.mxu0 0
    %342 = vmatpush1.bf16.msra.mxu0 0
    %343 = vmatprep.subr.bf16.mxu0 0
    %344 = vmatpush1.bf16.msra.mxu0 0
    %345 = vmatprep.subr.bf16.mxu0 0
    %346 = vmatpush1.bf16.msra.mxu0 0
    %347 = vmatprep.subr.bf16.mxu0 0
    %348 = vmatpush1.bf16.msra.mxu0 0
    %349 = vmatprep.subr.bf16.mxu0 0
    %350 = vmatpush1.bf16.msra.mxu0 0
    %351 = vmatprep.subr.bf16.mxu0 0
    %352 = vmatpush1.bf16.msra.mxu0 0
    %353 = vmatprep.subr.bf16.mxu0 0
    %354 = vmatpush1.bf16.msra.mxu0 0
    %355 = vmatprep.mubr.bf16.mxu0 0
    %356 = vmatmul.mubr.bf16.gmra.mrb[0].mxu0 %v259
    %v357 = vpop.f32.mrb[0].mxu0
    %v358 = vadd.f32 %v225, %v357
    %v359 = vpop.f32.mrb[0].mxu0
    %v360 = vpop.f32.mrb[0].mxu0
    %v361 = vadd.f32 %v225, %v360
    %v362 = vpop.f32.mrb[0].mxu0
    %363 = vmatprep.mubr.bf16.mxu0 0
    %364 = vmatmul.mubr.bf16.gmra.mrb[0].mxu0 %v260
    %v365 = vpop.f32.mrb[0].mxu0
    %v366 = vadd.f32 %v225, %v365
    %v367 = vpop.f32.mrb[0].mxu0
    %v368 = vpop.f32.mrb[0].mxu0
    %v369 = vadd.f32 %v225, %v368
    %v370 = vpop.f32.mrb[0].mxu0
    %371 = vmatprep.mubr.bf16.mxu0 0
    %372 = vmatmul.mubr.bf16.gmra.mrb[0].mxu0 %v261
    %v373 = vpop.f32.mrb[0].mxu0
    %v374 = vadd.f32 %v225, %v373
    %v375 = vpop.f32.mrb[0].mxu0
    %v376 = vpop.f32.mrb[0].mxu0
    %v377 = vadd.f32 %v225, %v376
    %v378 = vpop.f32.mrb[0].mxu0
    %379 = vmatprep.mubr.bf16.mxu0 0
    %380 = vmatmul.mubr.bf16.gmra.mrb[0].mxu0 %v262
    %v381 = vpop.f32.mrb[0].mxu0
    %v382 = vadd.f32 %v225, %v381
    %v383 = vpop.f32.mrb[0].mxu0
    %v384 = vpop.f32.mrb[0].mxu0
    %v385 = vadd.f32 %v225, %v384
    %v386 = vpop.f32.mrb[0].mxu0
    %387 = vmatprep.mubr.bf16.mxu0 0
    %388 = vmatmul.mubr.bf16.gmra.mrb[0].mxu0 %v263
    %v389 = vpop.f32.mrb[0].mxu0
    %v390 = vadd.f32 %v225, %v389
    %v391 = vpop.f32.mrb[0].mxu0
    %v392 = vpop.f32.mrb[0].mxu0
    %v393 = vadd.f32 %v225, %v392
    %v394 = vpop.f32.mrb[0].mxu0
    %395 = vmatprep.mubr.bf16.mxu0 0
    %396 = vmatmul.mubr.bf16.gmra.mrb[0].mxu0 %v264
    %v397 = vpop.f32.mrb[0].mxu0
    %v398 = vadd.f32 %v225, %v397
    %v399 = vpop.f32.mrb[0].mxu0
    %v400 = vpop.f32.mrb[0].mxu0
    %v401 = vadd.f32 %v225, %v400
    %v402 = vpop.f32.mrb[0].mxu0
    %403 = vmatprep.mubr.bf16.mxu0 0
    %404 = vmatmul.mubr.bf16.gmra.mrb[0].mxu0 %v265
    %v405 = vpop.f32.mrb[0].mxu0
    %v406 = vadd.f32 %v225, %v405
    %v407 = vpop.f32.mrb[0].mxu0
    %v408 = vpop.f32.mrb[0].mxu0
    %v409 = vadd.f32 %v225, %v408
    %v410 = vpop.f32.mrb[0].mxu0
    %411 = vmatprep.mubr.bf16.mxu0 0
    %412 = vmatmul.mubr.bf16.gmra.mrb[0].mxu0 %v266
    %v413 = vpop.f32.mrb[0].mxu0
    %v414 = vadd.f32 %v225, %v413
    %v415 = vpop.f32.mrb[0].mxu0
    %v416 = vpop.f32.mrb[0].mxu0
    %v417 = vadd.f32 %v225, %v416
    %v418 = vpop.f32.mrb[0].mxu0
    %419 = vdwg.mxu0
    %v420 = vmul.f32 %v183, %v183
    %421 = vadd.xlane.f32.xlu0 %v420
    %v422 = vpop.xlane.xlu0 %421
    %v423 = vmax.f32 %v422, 1e-24
    %v424 = vrsqrt.pop %v423
    %v425 = vmul.f32 %v183, %v424
    %v426 = vmul.f32 %v358, %v358
    %v427 = vmul.f32 %v361, %v361
    %v428 = vmul.f32 %v366, %v366
    %v429 = vmul.f32 %v369, %v369
    %v430 = vmul.f32 %v374, %v374
    %v431 = vmul.f32 %v377, %v377
    %v432 = vmul.f32 %v382, %v382
    %v433 = vmul.f32 %v385, %v385
    %v434 = vmul.f32 %v390, %v390
    %v435 = vmul.f32 %v393, %v393
    %v436 = vmul.f32 %v398, %v398
    %v437 = vmul.f32 %v401, %v401
    %v438 = vmul.f32 %v406, %v406
    %v439 = vmul.f32 %v409, %v409
    %v440 = vmul.f32 %v414, %v414
    %v441 = vmul.f32 %v417, %v417
    %442 = vadd.xlane.f32.xlu0 %v426
    %v443 = vpop.xlane.xlu0 %442
    %444 = vadd.xlane.f32.xlu0 %v427
    %v445 = vpop.xlane.xlu0 %444
    %446 = vadd.xlane.f32.xlu0 %v428
    %v447 = vpop.xlane.xlu0 %446
    %448 = vadd.xlane.f32.xlu0 %v429
    %v449 = vpop.xlane.xlu0 %448
    %450 = vadd.xlane.f32.xlu0 %v430
    %v451 = vpop.xlane.xlu0 %450
    %452 = vadd.xlane.f32.xlu0 %v431
    %v453 = vpop.xlane.xlu0 %452
    %454 = vadd.xlane.f32.xlu0 %v432
    %v455 = vpop.xlane.xlu0 %454
    %456 = vadd.xlane.f32.xlu0 %v433
    %v457 = vpop.xlane.xlu0 %456
    %458 = vadd.xlane.f32.xlu0 %v434
    %v459 = vpop.xlane.xlu0 %458
    %460 = vadd.xlane.f32.xlu0 %v435
    %v461 = vpop.xlane.xlu0 %460
    %462 = vadd.xlane.f32.xlu0 %v436
    %v463 = vpop.xlane.xlu0 %462
    %464 = vadd.xlane.f32.xlu0 %v437
    %v465 = vpop.xlane.xlu0 %464
    %466 = vadd.xlane.f32.xlu0 %v438
    %v467 = vpop.xlane.xlu0 %466
    %468 = vadd.xlane.f32.xlu0 %v439
    %v469 = vpop.xlane.xlu0 %468
    %470 = vadd.xlane.f32.xlu0 %v440
    %v471 = vpop.xlane.xlu0 %470
    %472 = vadd.xlane.f32.xlu0 %v441
    %v473 = vpop.xlane.xlu0 %472
    %v474 = vmax.f32 %v443, 1e-24
    %v475 = vmax.f32 %v445, 1e-24
    %v476 = vmax.f32 %v447, 1e-24
    %v477 = vmax.f32 %v449, 1e-24
    %v478 = vmax.f32 %v451, 1e-24
    %v479 = vmax.f32 %v453, 1e-24
    %v480 = vmax.f32 %v455, 1e-24
    %v481 = vmax.f32 %v457, 1e-24
    %v482 = vmax.f32 %v459, 1e-24
    %v483 = vmax.f32 %v461, 1e-24
    %v484 = vmax.f32 %v463, 1e-24
    %v485 = vmax.f32 %v465, 1e-24
    %v486 = vmax.f32 %v467, 1e-24
    %v487 = vmax.f32 %v469, 1e-24
    %v488 = vmax.f32 %v471, 1e-24
    %v489 = vmax.f32 %v473, 1e-24
    %v490 = vrsqrt.pop %v474
    %v491 = vrsqrt.pop %v475
    %v492 = vrsqrt.pop %v476
    %v493 = vrsqrt.pop %v477
    %v494 = vrsqrt.pop %v478
    %v495 = vrsqrt.pop %v479
    %v496 = vrsqrt.pop %v480
    %v497 = vrsqrt.pop %v481
    %v498 = vrsqrt.pop %v482
    %v499 = vrsqrt.pop %v483
    %v500 = vrsqrt.pop %v484
    %v501 = vrsqrt.pop %v485
    %v502 = vrsqrt.pop %v486
    %v503 = vrsqrt.pop %v487
    %v504 = vrsqrt.pop %v488
    %v505 = vrsqrt.pop %v489
    %v506 = vmul.f32 %v358, %v490
    %v507 = vmul.f32 %v361, %v491
    %v508 = vmul.f32 %v366, %v492
    %v509 = vmul.f32 %v369, %v493
    %v510 = vmul.f32 %v374, %v494
    %v511 = vmul.f32 %v377, %v495
    %v512 = vmul.f32 %v382, %v496
    %v513 = vmul.f32 %v385, %v497
    %v514 = vmul.f32 %v390, %v498
    %v515 = vmul.f32 %v393, %v499
    %v516 = vmul.f32 %v398, %v500
    %v517 = vmul.f32 %v401, %v501
    %v518 = vmul.f32 %v406, %v502
    %v519 = vmul.f32 %v409, %v503
    %v520 = vmul.f32 %v414, %v504
    %v521 = vmul.f32 %v417, %v505
    %s522 = sld [smem:[#allocation2]]
    %v523 = vpack.c.bf16 %v425, %v425
    %v524 = vpack.c.bf16 %v507, %v506
    %v525 = vpack.c.bf16 %v509, %v508
    %v526 = vpack.c.bf16 %v511, %v510
    %v527 = vpack.c.bf16 %v513, %v512
    %v528 = vpack.c.bf16 %v515, %v514
    %v529 = vpack.c.bf16 %v517, %v516
    %v530 = vpack.c.bf16 %v519, %v518
    %v531 = vpack.c.bf16 %v521, %v520
    %532 = vmatprep.subr.bf16.mxu0 0
    %533 = vmatpush1.bf16.xpose.msra.mxu0 %v524
    %534 = vmatprep.subr.bf16.mxu0 0
    %535 = vmatpush1.bf16.xpose.msra.mxu0 %v525
    %536 = vmatprep.subr.bf16.mxu0 0
    %537 = vmatpush1.bf16.xpose.msra.mxu0 %v526
    %538 = vmatprep.subr.bf16.mxu0 0
    %539 = vmatpush1.bf16.xpose.msra.mxu0 %v527
    %540 = vmatprep.subr.bf16.mxu0 0
    %541 = vmatpush1.bf16.xpose.msra.mxu0 %v528
    %542 = vmatprep.subr.bf16.mxu0 0
    %543 = vmatpush1.bf16.xpose.msra.mxu0 %v529
    %544 = vmatprep.subr.bf16.mxu0 0
    %545 = vmatpush1.bf16.xpose.msra.mxu0 %v530
    %546 = vmatprep.subr.bf16.mxu0 0
    %547 = vmatpush1.bf16.xpose.msra.mxu0 %v531
    %548 = vmatprep.subr.bf16.mxu0 0
    %549 = vmatpush1.bf16.xpose.msra.mxu0 0
    %550 = vmatprep.subr.bf16.mxu0 0
    %551 = vmatpush1.bf16.xpose.msra.mxu0 0
    %552 = vmatprep.subr.bf16.mxu0 0
    %553 = vmatpush1.bf16.xpose.msra.mxu0 0
    %554 = vmatprep.subr.bf16.mxu0 0
    %555 = vmatpush1.bf16.xpose.msra.mxu0 0
    %556 = vmatprep.subr.bf16.mxu0 0
    %557 = vmatpush1.bf16.xpose.msra.mxu0 0
    %558 = vmatprep.subr.bf16.mxu0 0
    %559 = vmatpush1.bf16.xpose.msra.mxu0 0
    %560 = vmatprep.subr.bf16.mxu0 0
    %561 = vmatpush1.bf16.xpose.msra.mxu0 0
    %562 = vmatprep.subr.bf16.mxu0 0
    %563 = vmatpush1.bf16.xpose.msra.mxu0 0
    %564 = vmatprep.mubr.bf16.mxu0 0
    %565 = vmatmul.mubr.bf16.gmra.mrb[0].mxu0 %v523
    %v566 = vpop.f32.mrb[0].mxu0
    %v567 = vadd.f32 0.0, %v566
    %v568 = vpop.f32.mrb[0].mxu0
    %v569 = vpop.f32.mrb[0].mxu0
    %v570 = vpop.f32.mrb[0].mxu0
    %571 = vdwg.mxu0
    %v572 = vstv %s522
    %v573 = vmul.f32 %v572, %v567
    %574 = vst [vmem:[#allocation10] sm:$0xff] %v573
    %v575 = vlaneseq
    %v576 = vand.u32 %v575, 127
    %vm577 = vcmp.lt.s32.totalorder %v576, 4
    %v578 = vsel %vm577, %v573, -1e+30
    %579 = vmax.xlane.f32.xlu0 %v578
    %v580 = vpop.xlane.xlu0 %579
    %v581 = vsub.f32 %v578, %v580
    %v582 = vmul.f32 %v581, 1.442695
    %v583 = vpow.pop %v582
    %584 = vadd.xlane.f32.xlu0 %v583
    %v585 = vpop.xlane.xlu0 %584
    %v586 = vlog2.pop %v585
    %v587 = vmul.f32 %v586, 0.6931472
    %v588 = vadd.f32 %v580, %v587
    %v589 = vld [vmem:[%s1] sm:$0xff]
    %590 = vset.pattern.permute.xlu0 0
    %591 = vperm.xlu0 %590, %v589
    %v592 = vpop.permute.xlu0 %591
    %vm593 = vcmp.eq.s32.totalorder %v576, %v592
    %v594 = vsel %vm593, %v573, 0.0
    %595 = vadd.xlane.f32.xlu0 %v594
    %v596 = vpop.xlane.xlu0 %595
    %v597 = vlaneseq
    %v598 = vshrl.u32 %v597, 7
    %vm599 = vcmp.lt.s32.totalorder %v598, 2
    %v600 = vsub.f32 %v588, %v596
    %v601 = vsel %vm599, %v600, 0.0
    %vm602 = vcmask 7168
    %v603 = vsel %vm602, %v601, 0.0
    %604 = vadd.xlane.f32.xlu0 %v603
    %v605 = vpop.xlane.xlu0 %604
    %v606 = vrot.slane %v605, 4
    %v607 = vadd.f32 %v605, %v606
    %v608 = vrot.slane %v607, 2
    %v609 = vadd.f32 %v607, %v608
    %v610 = vrot.slane %v609, 1
    %v611 = vadd.f32 %v609, %v610
    %s612 = vtos %v611
    %v613 = vrcp.pop 2.0
    %s614 = vtos %v613
    %s615 = smul.f32 %s612, %s614
    %s616 = scalar_lea.smem [#allocation11], 0
    %617 = sst [smem:[%s616]] %s615
    // Predicated region
    $region46: #{tpu_custom_call.1} parent=1 // pred_check
      _
    $region47: #{tpu_custom_call.1} parent=1 // pred_check_branch
      %619 = sbr.rel (0) target = $region49
    $region48: #{tpu_custom_call.1} parent=1 // pred_region
      %s621 = ssub.s32 128, 128
      %622 = vsyncadd [#allocation5], %s621
      %s624 = sshll.u32 [#allocation10], 4
      %s625 = int_to_ptr.vmem [resolvable:$true] %s624
      %627 = dma.vmem_to_hbm [thread:$0]  %s625, 128, %s8, [#allocation5]
    $region49: #{tpu_custom_call.1} parent=1 // pred_fallthru
      _
    // Predicated region
    $region50: #{tpu_custom_call.1} parent=1 // pred_check
      _
    $region51: #{tpu_custom_call.1} parent=1 // pred_check_branch
      %629 = sbr.rel (0) target = $region53
    $region52: #{tpu_custom_call.1} parent=1 // pred_region
      %s631 = ssub.s32 16, 16
      %632 = vsyncadd [#allocation6], %s631
      %635 = dma.smem_to_hbm [#allocation11], 16, %s9, [#allocation6]
    $region53: #{tpu_custom_call.1} parent=1 // pred_fallthru
      _
    // Predicated region
    $region54: #{tpu_custom_call.1} parent=1 // pred_check
      _
    $region55: #{tpu_custom_call.1} parent=1 // pred_check_branch
      %637 = sbr.rel (0) target = $region57
    $region56: #{tpu_custom_call.1} parent=1 // pred_region
      %638 = dma.done [#allocation5], 128
    $region57: #{tpu_custom_call.1} parent=1 // pred_fallthru
      _
    // Predicated region
    $region58: #{tpu_custom_call.1} parent=1 // pred_check
      _
    $region59: #{tpu_custom_call.1} parent=1 // pred_check_branch
      %640 = sbr.rel (0) target = $region61
    $region60: #{tpu_custom_call.1} parent=1 // pred_region
      %641 = dma.done [#allocation6], 16
    $region61: #{tpu_custom_call.1} parent=1 // pred_fallthru
      _
    %642 = sfence
    %643 = vsyncpa [#allocation4], 1
    %644 = vsyncpa [#allocation8], 1
    %645 = vsyncpa [#allocation5], 1
    %646 = vsyncpa [#allocation6], 1

</llo_original>
